<compile_context>
chip_gen: v7x
topology: tpu7x:2x2x1
jax: 0.10.0
libtpu: 0.0.40
codegen_flags: <defaults>
</compile_context>

<pallas_src>
import math
import functools

import jax
import jax.numpy as jnp
from jax.experimental import pallas as pl
from jax.experimental.pallas import tpu as pltpu


def _bias_add_kernel(bias_ref, qk_ref, o_ref):
    """bias_ref: (ti, tj) tile for the current head; qk_ref / o_ref: (bb, ti, tj)."""
    o_ref[...] = (qk_ref[...] + bias_ref[...][None, :, :]).astype(o_ref.dtype)


def _relative_position_bucket(rel_pos, *, causal, num_buckets, max_distance):
    """Pure-JAX port of RelativePositionBias._relative_position_bucket."""
    n = -rel_pos
    if causal:
        nb = num_buckets
        n = jnp.maximum(n, 0)
        ret = jnp.zeros_like(n)
    else:
        nb = num_buckets // 2
        ret = (n < 0).astype(jnp.int32) * nb
        n = jnp.abs(n)
    max_exact = nb // 2
    is_small = n < max_exact
    # clamp to >=1 before log so the (discarded) large-branch value is finite at n==0
    n_f = jnp.maximum(n, 1).astype(jnp.float32)
    val_if_large = max_exact + (
        jnp.log(n_f / max_exact) / math.log(max_distance / max_exact)
        * (nb - max_exact)
    ).astype(jnp.int32)  # trunc-toward-zero == torch .long() on the selected branch
    val_if_large = jnp.minimum(val_if_large, nb - 1)
    return ret + jnp.where(is_small, n, val_if_large)


def _pick_tile(n, target, quantum):
    """Full dim if n <= target; else a multiple of `quantum` near `target`
    (prefer divisors of n, otherwise accept a ragged edge block)."""
    if n <= target:
        return n
    t = max(quantum, (target // quantum) * quantum)
    d = t
    while d >= max(quantum, t // 2):
        if n % d == 0:
            return d
        d -= quantum
    return t


def _shrink_tile(cur, quantum):
    nxt = ((cur // 2) // quantum) * quantum
    return nxt if quantum <= nxt < cur else None


@functools.partial(jax.jit,
                   static_argnames=("causal", "num_buckets", "max_distance"),
                   donate_argnums=(0,))
def relative_position_bias(qk_dots, emb_weight, scale, *, causal=False,
                           num_buckets=32, max_distance=128):
    """qk_dots: (B, H, I, J) -- DONATED (consumed); emb_weight: (num_buckets, H)."""
    B, H, I, J = qk_dots.shape
    assert emb_weight.shape == (num_buckets, H)

    esz = jnp.dtype(qk_dots.dtype).itemsize
    bias_dtype = (qk_dots.dtype
                  if (jnp.issubdtype(qk_dots.dtype, jnp.floating) and esz < 4)
                  else jnp.float32)
    bias_esz = jnp.dtype(bias_dtype).itemsize

    # ---- wrapper-side prep: O(H*I*J) bucket math + 32-entry gather, scale folded ----
    q_pos = jnp.arange(I, dtype=jnp.int32)
    k_pos = jnp.arange(J, dtype=jnp.int32)
    rel_pos = k_pos[None, :] - q_pos[:, None]                       # (I, J)
    bucket = _relative_position_bucket(
        rel_pos, causal=causal, num_buckets=num_buckets, max_distance=max_distance)
    table_t = (emb_weight.astype(jnp.float32) * scale).T            # (H, NB), scale folded
    bias = jnp.take(table_t, bucket, axis=1).astype(bias_dtype)     # (H, I, J)

    # ---- dtype-aware tiling with generation-aware VMEM budget ----
    sub_q = {4: 8, 2: 16, 1: 32}.get(esz, 8)
    lane_q = 128
    try:
        phys_vmem = int(pltpu.get_tpu_info().vmem_capacity_bytes)   # 64 MiB v7x, 128 MiB v5e/v6e
    except Exception:
        phys_vmem = 64 * 1024 * 1024                                 # conservative fallback
    ws_budget = (phys_vmem * 55) // 100       # working set incl. double buffering

    tj = _pick_tile(J, 1024, lane_q)
    ti = _pick_tile(I, 512 if B <= 4 else 256, sub_q)
    bb = B

    def working_set(bb_, ti_, tj_):
        # double-buffered qk-in + out blocks + double-buffered bias block
        return 2 * ti_ * tj_ * (2 * bb_ * esz + bias_esz)

    while working_set(bb, ti, tj) > ws_budget:
        nxt = _shrink_tile(ti, sub_q)
        if nxt is not None:
            ti = nxt
            continue
        nxt = _shrink_tile(tj, lane_q)
        if nxt is not None:
            tj = nxt
            continue
        if bb > 1:
            bb = max(1, bb // 2)
            continue
        break

    vmem_limit = int(min(phys_vmem * 3 // 4,
                         max(32 * 1024 * 1024, working_set(bb, ti, tj) * 5 // 4)))

    # Head axis leads (even split across v7x's 2 TensorCores); batch innermost so
    # the bias block index is invariant across it and its re-DMA is elided.
    grid = (H, pl.cdiv(I, ti), pl.cdiv(J, tj), pl.cdiv(B, bb))

    cost = pl.CostEstimate(
        flops=B * H * I * J,
        transcendentals=0,
        bytes_accessed=(2 * B * esz + bias_esz) * H * I * J)

    return pl.pallas_call(
        _bias_add_kernel,
        out_shape=jax.ShapeDtypeStruct((B, H, I, J), qk_dots.dtype),
        grid=grid,
        in_specs=[
            # per-head bias tile (H dim squeezed out of the kernel ref)
            pl.BlockSpec((None, ti, tj), lambda h, i, j, b: (h, i, j)),
            # qk tile: batch tile, one head, one spatial tile
            pl.BlockSpec((bb, None, ti, tj), lambda h, i, j, b: (b, h, i, j)),
        ],
        out_specs=pl.BlockSpec((bb, None, ti, tj), lambda h, i, j, b: (b, h, i, j)),
        input_output_aliases={1: 0},   # output aliases (donated) qk_dots
        compiler_params=pltpu.CompilerParams(
            dimension_semantics=("parallel", "parallel", "parallel", "parallel"),
            vmem_limit_bytes=vmem_limit),
        cost_estimate=cost,
    )(bias, qk_dots)


def _reference(qk_dots, emb_weight, *, scale, causal, num_buckets, max_distance):
    """Pure-JAX reference mirroring the PyTorch module."""
    I, J = qk_dots.shape[-2:]
    rel = (jnp.arange(J, dtype=jnp.int32)[None, :]
           - jnp.arange(I, dtype=jnp.int32)[:, None])
    bucket = _relative_position_bucket(
        rel, causal=causal, num_buckets=num_buckets, max_distance=max_distance)
    values = emb_weight[bucket]                     # (I, J, H)
    bias = jnp.transpose(values, (2, 0, 1))[None]   # (1, H, I, J)
    return qk_dots + bias * scale


if __name__ == "__main__":
    # Module config (synthetic, deterministic init — no checkpoint load)
    NUM_BUCKETS = 32
    MAX_DISTANCE = 128
    HEADS = 8
    SCALE = 0.125  # e.g. dim ** -0.5

    B, H, I, J = 2, HEADS, 256, 384   # small but lane-dense (I, J multiples of (8, 128))

    key = jax.random.PRNGKey(0)
    k_qk, k_emb = jax.random.split(key)
    qk_dots = jax.random.normal(k_qk, (B, H, I, J), dtype=jnp.float32)
    emb_weight = (jax.random.normal(k_emb, (NUM_BUCKETS, HEADS), dtype=jnp.float32)
                  * 0.02)  # nn.Embedding-style weight (num_buckets, heads)

    for causal in (False, True):
        ref = _reference(qk_dots, emb_weight, scale=SCALE, causal=causal,
                         num_buckets=NUM_BUCKETS, max_distance=MAX_DISTANCE)
        # qk_dots is donated by the wrapper -> hand it a private copy so the
        # original stays alive for the reference comparison.
        out = relative_position_bias(jnp.copy(qk_dots), emb_weight, SCALE,
                                     causal=causal, num_buckets=NUM_BUCKETS,
                                     max_distance=MAX_DISTANCE)
        out = jax.block_until_ready(out)
        assert out.shape == (B, H, I, J) and out.dtype == jnp.float32
        assert jnp.allclose(out, ref, rtol=1e-5, atol=1e-5), \
            f"mismatch vs reference (causal={causal})"

    print("KERNEL_OK")
</pallas_src>

<mosaic_0001>
module attributes {stable_mosaic.version = 11 : i64} {
  func.func @_bias_add_kernel(%arg0: i32, %arg1: i32, %arg2: i32, %arg3: i32, %arg4: memref<1x256x384xf32, #tpu.memory_space<vmem>>, %arg5: memref<2x1x256x384xf32, #tpu.memory_space<vmem>>, %arg6: memref<2x1x256x384xf32, #tpu.memory_space<vmem>>) attributes {dimension_semantics = [#tpu.dimension_semantics<parallel>, #tpu.dimension_semantics<parallel>, #tpu.dimension_semantics<parallel>, #tpu.dimension_semantics<parallel>], iteration_bounds = array<i64: 8, 1, 1, 1>, scalar_prefetch = 0 : i64, scratch_operands = 0 : i64, tpu.core_type = #tpu.core_type<tc>, window_params = [{transform_indices = @transform_0, window_bounds = array<i64: 1, 256, 384>}, {transform_indices = @transform_1, window_bounds = array<i64: 2, 1, 256, 384>}, {transform_indices = @transform_2, window_bounds = array<i64: 2, 1, 256, 384>}]} {
    %c0 = arith.constant 0 : index
    %c0_0 = arith.constant 0 : index
    %c0_1 = arith.constant 0 : index
    %c0_2 = arith.constant 0 : index
    %0 = vector.load %arg5[%c0, %c0_0, %c0_1, %c0_2] : memref<2x1x256x384xf32, #tpu.memory_space<vmem>>, vector<2x1x256x384xf32>
    %1 = vector.shape_cast %0 : vector<2x1x256x384xf32> to vector<2x256x384xf32>
    %c0_3 = arith.constant 0 : index
    %c0_4 = arith.constant 0 : index
    %c0_5 = arith.constant 0 : index
    %2 = vector.load %arg4[%c0_3, %c0_4, %c0_5] : memref<1x256x384xf32, #tpu.memory_space<vmem>>, vector<1x256x384xf32>
    %3 = vector.shape_cast %2 : vector<1x256x384xf32> to vector<256x384xf32>
    %4 = vector.shape_cast %3 : vector<256x384xf32> to vector<1x256x384xf32>
    %5 = vector.broadcast %4 : vector<1x256x384xf32> to vector<2x256x384xf32>
    %6 = arith.addf %1, %5 : vector<2x256x384xf32>
    %c0_6 = arith.constant 0 : index
    %c0_7 = arith.constant 0 : index
    %c0_8 = arith.constant 0 : index
    %c0_9 = arith.constant 0 : index
    %7 = vector.load %arg6[%c0_6, %c0_7, %c0_8, %c0_9] : memref<2x1x256x384xf32, #tpu.memory_space<vmem>>, vector<2x1x256x384xf32>
    %8 = vector.shape_cast %7 : vector<2x1x256x384xf32> to vector<2x256x384xf32>
    %9 = vector.shape_cast %6 : vector<2x256x384xf32> to vector<2x1x256x384xf32>
    tpu.vector_store %arg6[%c0_6, %c0_7, %c0_8, %c0_9], %9 {strides = array<i32>} : memref<2x1x256x384xf32, #tpu.memory_space<vmem>>, vector<2x1x256x384xf32>,
    return
  }
  func.func @transform_0(%arg0: i32, %arg1: i32, %arg2: i32, %arg3: i32) -> (i32, i32, i32) {
    %c0_i32 = arith.constant 0 : i32
    return %arg0, %arg1, %arg2 : i32, i32, i32
  }
  func.func @transform_1(%arg0: i32, %arg1: i32, %arg2: i32, %arg3: i32) -> (i32, i32, i32, i32) {
    %c0_i32 = arith.constant 0 : i32
    return %arg3, %arg0, %arg1, %arg2 : i32, i32, i32, i32
  }
  func.func @transform_2(%arg0: i32, %arg1: i32, %arg2: i32, %arg3: i32) -> (i32, i32, i32, i32) {
    %c0_i32 = arith.constant 0 : i32
    return %arg3, %arg0, %arg1, %arg2 : i32, i32, i32, i32
  }
}

</mosaic_0001>

<llo_original>
// kernel: relative_position_bias.1
$region0: #{relative_position_bias.1}
  #allocation0 [shape = 'u32[]', space=smem, size = 0x4, offset = 0x4, fixed_abs, tag = 'smem constant byte address 0x4 - core index']
  #allocation1 [shape = 'u32[144,128]{1,0:T(1,128)}', space=vmem, size = 0x12000, scoped, tag = 'internal scratch']
  #allocation6 [shape = 's32[]', space=sflag, size = 0x4, offset = 0, fixed_abs, tag = 'sflag constant byte address 0x0 - dummy sync flag']
  #allocation8 [shape = 's32[]', space=sflag, size = 0x4, offset = 0, fixed_abs, tag = 'sflag constant byte address 0x0 - dummy sync flag']
  %s0 = inlined_call_operand.vmem [shape: f32[8,256,384], index: 0, kind: input, shape index: {}]
  %s1 = inlined_call_operand.hbm [shape: f32[2,8,256,384], index: 1, kind: input, shape index: {}, may-alias: {1,2}]
  %s2 = inlined_call_operand.hbm [shape: f32[2,8,256,384], index: 2, kind: output, shape index: {}, may-alias: {1,2}]
  %s3 = sld [smem:[#allocation0]]
  $region45: #{relative_position_bias.1} parent=0
    _
  %s5 = ssub.s32 1, %s3
  %s6 = scalar_select 0, %s5, %s3
  $region1: #{relative_position_bias.1} parent=0
    #allocation2 [shape = 'u8[1572864]{0}', space=vmem, size = 0x180000, scoped, tag = 'input window, operand 1']
    #allocation3 [shape = 's32[2]{0}', space=sflag, size = 0x8, scoped, tag = 'scoped memory for relative_position_bias.1']
    #allocation4 [shape = 's32[2]{0}', space=sflag, size = 0x8, scoped, tag = 'scoped memory for relative_position_bias.1']
    #allocation5 [shape = 'u8[1572864]{0}', space=vmem, size = 0x180000, scoped, tag = 'output window, operand 0']
    %7 = vsyncpa [#allocation3], 0
    %s8 = scalar_lea.sflag [#allocation3], 1
    %9 = vsyncpa %s8, 0
    %10 = vsyncpa [#allocation4], 0
    %s11 = scalar_lea.sflag [#allocation4], 1
    %12 = vsyncpa %s11, 0
    loop: start=0, step=1, limit=10
    $region2: #{relative_position_bias.1} parent=1 // loop_pre_header
      _
    $region3: #{relative_position_bias.1} parent=1 // loop_header
      %s14 = sphi 0, %s18
      %p15 = scmp.ge.s32.totalorder %s14, 10
      %s21 = sphi 0, %s47
      %s22 = sphi 0, %s43
      %s23 = sphi 0, %s39
      %s24 = sphi 0, %s35
      %s25 = sphi 0, %s21
      %s26 = sphi 0, %s22
      %s27 = sphi 0, %s23
      %s28 = sphi 0, %s24
      %s29 = sphi 0, %s25
      %s30 = sphi 0, %s26
      %s31 = sphi 0, %s27
      %s32 = sphi 0, %s28
      %s54 = sphi 0, %s56
      %s57 = sphi 0, %s54
      %s58 = sphi 0, %s57
      %s74 = sphi 0, %s58
      %s86 = sphi 0, %s88
      %s89 = sphi 0, %s86
      %s90 = sphi 0, %s89
      %s106 = sphi 0, %s90
      %s118 = sphi 0, %s120
      %s121 = sphi 0, %s118
      %s122 = sphi 0, %s121
      %s138 = sphi 0, %s122
    $region4: #{relative_position_bias.1} parent=1 // loop_header_branch
      %17 = sbr.rel (%p15) target = $region8
    $region5: #{relative_position_bias.1} parent=1 // loop_body
      %s19 = ssub.s32 %s14, 1
      %s20 = ssub.s32 %s14, 2
      %s33 = sadd.s32 1, %s24
      %p34 = scmp.ge.s32.totalorder %s33, 1
      %s35 = scalar_select %p34, 0, %s33
      %s36 = sadd.s32 1, %s23
      %s37 = scalar_select %p34, %s36, %s23
      %p38 = scmp.ge.s32.totalorder %s37, 1
      %s39 = scalar_select %p38, 0, %s37
      %s40 = sadd.s32 1, %s22
      %s41 = scalar_select %p38, %s40, %s22
      %p42 = scmp.ge.s32.totalorder %s41, 1
      %s43 = scalar_select %p42, 0, %s41
      %s44 = sadd.s32 1, %s21
      %s45 = scalar_select %p42, %s44, %s21
      %p46 = scmp.ge.s32.totalorder %s45, 8
      %s47 = scalar_select %p46, 0, %s45
      %s48 = ssub.s32 %s21, %s47
      %s49 = ssub.s32 %s22, %s43
      %s50 = sor.u32 %s48, %s49
      %s51 = ssub.s32 %s23, %s39
      %s52 = sor.u32 %s50, %s51
      %p53 = scmp.eq.s32.totalorder %s52, 0
      %s55 = sadd.s32 %s54, 1
      %s56 = scalar_select %p53, %s54, %s55
      %p59 = pneg %p53
      %p60 = scmp.eq.s32.totalorder %s14, 7
      %p61 = por %p59, %p60
      %p62 = scmp.ne.s32.totalorder %s54, %s57
      %p63 = scmp.eq.s32.totalorder %s14, 0
      %p64 = por %p62, %p63
      %p65 = scmp.ne.s32.totalorder %s54, %s57
      %p66 = scmp.eq.s32.totalorder %s19, 7
      %p67 = por %p65, %p66
      %p68 = scmp.ne.s32.totalorder %s57, %s58
      %p69 = scmp.eq.s32.totalorder %s19, 0
      %p70 = por %p68, %p69
      %p71 = scmp.ne.s32.totalorder %s57, %s58
      %p72 = scmp.eq.s32.totalorder %s20, 7
      %p73 = por %p71, %p72
      %p75 = scmp.ne.s32.totalorder %s58, %s74
      %p76 = scmp.eq.s32.totalorder %s20, 0
      %p77 = por %p75, %p76
      %s78 = ssub.s32 %s24, %s35
      %s79 = ssub.s32 %s21, %s47
      %s80 = sor.u32 %s78, %s79
      %s81 = ssub.s32 %s22, %s43
      %s82 = sor.u32 %s80, %s81
      %s83 = ssub.s32 %s23, %s39
      %s84 = sor.u32 %s82, %s83
      %p85 = scmp.eq.s32.totalorder %s84, 0
      %s87 = sadd.s32 %s86, 1
      %s88 = scalar_select %p85, %s86, %s87
      %p91 = pneg %p85
      %p92 = scmp.eq.s32.totalorder %s14, 7
      %p93 = por %p91, %p92
      %p94 = scmp.ne.s32.totalorder %s86, %s89
      %p95 = scmp.eq.s32.totalorder %s14, 0
      %p96 = por %p94, %p95
      %p97 = scmp.ne.s32.totalorder %s86, %s89
      %p98 = scmp.eq.s32.totalorder %s19, 7
      %p99 = por %p97, %p98
      %p100 = scmp.ne.s32.totalorder %s89, %s90
      %p101 = scmp.eq.s32.totalorder %s19, 0
      %p102 = por %p100, %p101
      %p103 = scmp.ne.s32.totalorder %s89, %s90
      %p104 = scmp.eq.s32.totalorder %s20, 7
      %p105 = por %p103, %p104
      %p107 = scmp.ne.s32.totalorder %s90, %s106
      %p108 = scmp.eq.s32.totalorder %s20, 0
      %p109 = por %p107, %p108
      %s110 = ssub.s32 %s24, %s35
      %s111 = ssub.s32 %s21, %s47
      %s112 = sor.u32 %s110, %s111
      %s113 = ssub.s32 %s22, %s43
      %s114 = sor.u32 %s112, %s113
      %s115 = ssub.s32 %s23, %s39
      %s116 = sor.u32 %s114, %s115
      %p117 = scmp.eq.s32.totalorder %s116, 0
      %s119 = sadd.s32 %s118, 1
      %s120 = scalar_select %p117, %s118, %s119
      %p123 = pneg %p117
      %p124 = scmp.eq.s32.totalorder %s14, 7
      %p125 = por %p123, %p124
      %p126 = scmp.ne.s32.totalorder %s118, %s121
      %p127 = scmp.eq.s32.totalorder %s14, 0
      %p128 = por %p126, %p127
      %p129 = scmp.ne.s32.totalorder %s118, %s121
      %p130 = scmp.eq.s32.totalorder %s19, 7
      %p131 = por %p129, %p130
      %p132 = scmp.ne.s32.totalorder %s121, %s122
      %p133 = scmp.eq.s32.totalorder %s19, 0
      %p134 = por %p132, %p133
      %p135 = scmp.ne.s32.totalorder %s121, %s122
      %p136 = scmp.eq.s32.totalorder %s20, 7
      %p137 = por %p135, %p136
      %p139 = scmp.ne.s32.totalorder %s122, %s138
      %p140 = scmp.eq.s32.totalorder %s20, 0
      %p141 = por %p139, %p140
      %p142 = scmp.le.s32.totalorder 1, %s14
      %p143 = scmp.lt.s32.totalorder %s14, 9
      %p144 = pnand %p142, %p143
      %p145 = pneg %p144
      // Predicated region
      $region9: #{relative_position_bias.1} parent=5 // pred_check
        _
      $region10: #{relative_position_bias.1} parent=5 // pred_check_branch
        %147 = sbr.rel (%p144) target = $region12
      $region11: #{relative_position_bias.1} parent=5 // pred_region
        %s148 = ssub.s32 %s14, 1
      $region12: #{relative_position_bias.1} parent=5 // pred_fallthru
        _
      %p149 = scmp.lt.s32.totalorder %s14, 8
      // Predicated region
      $region13: #{relative_position_bias.1} parent=5 // pred_check
        %p150 = pneg %p149
      $region14: #{relative_position_bias.1} parent=5 // pred_check_branch
        %152 = sbr.rel (%p150) target = $region16
      $region15: #{relative_position_bias.1} parent=5 // pred_region
        // Predicated region
        $region17: #{relative_position_bias.1} parent=15 // pred_check
          %p153 = pneg %p64
        $region18: #{relative_position_bias.1} parent=15 // pred_check_branch
          %155 = sbr.rel (%p153) target = $region20
        $region19: #{relative_position_bias.1} parent=15 // pred_region
          %s156 = smul.u32 32, %s22
          %s157 = smul.u32 3, %s23
          %p158 = scmp.lt.s32.totalorder %s21, 7
          %s159 = scalar_select %p158, %s21, 7
          %p160 = scmp.lt.s32.totalorder %s156, 31
          %s161 = scalar_select %p160, %s156, 31
          %p162 = scmp.lt.s32.totalorder %s157, 2
          %s163 = scalar_select %p162, %s157, 2
          %s164 = smul.addr %s161, 3
          %s165 = sadd.s32 %s163, %s164
          %s166 = smul.addr %s159, 96
          %s167 = sadd.s32 %s165, %s166
          %s168 = smul.addr %s167, 8
          %s169 = scalar_lea.vmem %s0, %s168
          %s170 = smul.u32 32, %s22
          %s171 = smul.u32 3, %s23
        $region20: #{relative_position_bias.1} parent=15 // pred_fallthru
          _
        // Predicated region
        $region21: #{relative_position_bias.1} parent=15 // pred_check
          %p172 = pneg %p96
        $region22: #{relative_position_bias.1} parent=15 // pred_check_branch
          %174 = sbr.rel (%p172) target = $region24
        $region23: #{relative_position_bias.1} parent=15 // pred_region
          #allocation7 [shape = 'u32[6]{0}', space=smem, size = 0x18, scoped, tag = 'DMA stride descriptor']
          %s175 = sand.u32 %s86, 1
          %s176 = scalar_lea.sflag [#allocation3], %s175
          %s177 = sand.u32 %s86, 1
          %s178 = smul.addr %s177, 1536
          %s179 = scalar_lea.vmem [#allocation2], %s178
          %s180 = smul.u32 2, %s24
          %s181 = smul.u32 32, %s22
          %s182 = smul.u32 3, %s23
          %s184 = ssub.s32 24576, 24576
          %185 = vsyncadd %s176, %s184
          %s186 = smul.addr %s181, 3
          %s187 = sadd.s32 %s182, %s186
          %s188 = smul.addr %s21, 96
          %s189 = sadd.s32 %s187, %s188
          %s190 = smul.addr %s180, 768
          %s191 = sadd.s32 %s189, %s190
          %s192 = smul.addr %s191, 128
          %s193 = scalar_lea.hbm %s1, %s192
          %s195 = sshll.u32 1, 14
          %s196 = sxor.u32 4294967295, %s195
          %s198 = sld [smem:[#allocation0]]
          %s199 = sadd.s32 2, %s198
          %s201 = sshll.u32 7, 26
          %s202 = sxor.u32 4294967295, %s201
          %s203 = sand.u32 0, %s202
          %s204 = sshll.u32 %s199, 26
          %s205 = sor.u32 %s203, %s204
          %s206 = sshll.u32 %s179, 4
          %s207 = int_to_ptr.vmem [resolvable:$true] %s206
          %213 = sst [smem:[#allocation7]] 98304
          %s214 = scalar_lea.smem [#allocation7], 1
          %215 = sst [smem:[%s214]] 12288
          %s216 = scalar_lea.smem [#allocation7], 2
          %217 = sst [smem:[%s216]] 32
          %s218 = scalar_lea.smem [#allocation7], 3
          %219 = sst [smem:[%s218]] 384
          %s220 = scalar_lea.smem [#allocation7], 4
          %221 = sst [smem:[%s220]] 384
          %s222 = scalar_lea.smem [#allocation7], 5
          %223 = sst [smem:[%s222]] 24
          %225 = dma.general %s193, 24576, %s207, %s176, [#allocation6], [#allocation7], %s205, 0
        $region24: #{relative_position_bias.1} parent=15 // pred_fallthru
          _
      $region16: #{relative_position_bias.1} parent=5 // pred_fallthru
        _
      %p226 = scmp.le.s32.totalorder 1, %s14
      %p227 = scmp.lt.s32.totalorder %s14, 9
      %p228 = pnand %p226, %p227
      %p229 = pneg %p228
      // Predicated region
      $region25: #{relative_position_bias.1} parent=5 // pred_check
        _
      $region26: #{relative_position_bias.1} parent=5 // pred_check_branch
        %231 = sbr.rel (%p228) target = $region28
      $region27: #{relative_position_bias.1} parent=5 // pred_region
        %s232 = ssub.s32 %s14, 1
        %s233 = sand.u32 %s89, 1
        %s234 = scalar_lea.sflag [#allocation3], %s233
        %s235 = sand.u32 %s89, 1
        %s236 = smul.addr %s235, 1536
        %s237 = scalar_lea.vmem [#allocation2], %s236
        // Predicated region
        $region29: #{relative_position_bias.1} parent=27 // pred_check
          %p238 = pneg %p102
        $region30: #{relative_position_bias.1} parent=27 // pred_check_branch
          %240 = sbr.rel (%p238) target = $region32
        $region31: #{relative_position_bias.1} parent=27 // pred_region
          %241 = dma.done %s234, 24576
        $region32: #{relative_position_bias.1} parent=27 // pred_fallthru
          _
        %s242 = smul.u32 32, %s26
        %s243 = smul.u32 3, %s27
        %p244 = scmp.lt.s32.totalorder %s25, 7
        %s245 = scalar_select %p244, %s25, 7
        %p246 = scmp.lt.s32.totalorder %s242, 31
        %s247 = scalar_select %p246, %s242, 31
        %p248 = scmp.lt.s32.totalorder %s243, 2
        %s249 = scalar_select %p248, %s243, 2
        %s250 = smul.addr %s247, 3
        %s251 = sadd.s32 %s249, %s250
        %s252 = smul.addr %s245, 96
        %s253 = sadd.s32 %s251, %s252
        %s254 = smul.addr %s253, 8
        %s255 = scalar_lea.vmem %s0, %s254
        %p256 = pneg %p70
        %p257 = pneg %p67
        %s258 = sand.u32 %s89, 1
        %s259 = scalar_lea.sflag [#allocation3], %s258
        %s260 = sand.u32 %s89, 1
        %s261 = smul.addr %s260, 1536
        %s262 = scalar_lea.vmem [#allocation2], %s261
        %p263 = pneg %p102
        %p264 = pneg %p99
        %p265 = pneg %p134
        %p266 = pneg %p131
        %s267 = sand.u32 %s121, 1
        %s268 = scalar_lea.sflag [#allocation4], %s267
        %s269 = sand.u32 %s121, 1
        %s270 = smul.addr %s269, 1536
        %s271 = scalar_lea.vmem [#allocation5], %s270
        %s272 = smul.u32 32, %s26
        %s273 = smul.u32 3, %s27
        %p274 = scmp.lt.s32.totalorder %s25, 7
        %s275 = scalar_select %p274, %s25, 7
        %p276 = scmp.lt.s32.totalorder %s272, 31
        %s277 = scalar_select %p276, %s272, 31
        %p278 = scmp.lt.s32.totalorder %s273, 2
        %s279 = scalar_select %p278, %s273, 2
        %s280 = smul.addr %s277, 3
        %s281 = sadd.s32 %s279, %s280
        %s282 = smul.addr %s275, 96
        %s283 = sadd.s32 %s281, %s282
        %s284 = smul.addr %s283, 8
        %s285 = scalar_lea.vmem %s0, %s284
        %s286 = smul.u32 32, %s26
        %s287 = smul.u32 3, %s27
        %s288 = smul.u32 2, %s28
        %s289 = smul.u32 32, %s26
        %s290 = smul.u32 3, %s27
        %s291 = smul.u32 2, %s28
        %s292 = smul.u32 32, %s26
        %s293 = smul.u32 3, %s27
        %v294 = vld [vmem:[%s237] sm:$0xff]
        %v295 = vld [vmem:[%s237 + $0x8] sm:$0xff]
        %v296 = vld [vmem:[%s237 + $0x10] sm:$0xff]
        %v297 = vld [vmem:[%s237 + $0x18] sm:$0xff]
        %v298 = vld [vmem:[%s237 + $0x20] sm:$0xff]
        %v299 = vld [vmem:[%s237 + $0x28] sm:$0xff]
        %v300 = vld [vmem:[%s237 + $0x30] sm:$0xff]
        %v301 = vld [vmem:[%s237 + $0x38] sm:$0xff]
        %v302 = vld [vmem:[%s237 + $0x40] sm:$0xff]
        %v303 = vld [vmem:[%s237 + $0x48] sm:$0xff]
        %v304 = vld [vmem:[%s237 + $0x50] sm:$0xff]
        %v305 = vld [vmem:[%s237 + $0x58] sm:$0xff]
        %v306 = vld [vmem:[%s237 + $0x60] sm:$0xff]
        %v307 = vld [vmem:[%s237 + $0x68] sm:$0xff]
        %v308 = vld [vmem:[%s237 + $0x70] sm:$0xff]
        %v309 = vld [vmem:[%s237 + $0x78] sm:$0xff]
        %v310 = vld [vmem:[%s237 + $0x80] sm:$0xff]
        %v311 = vld [vmem:[%s237 + $0x88] sm:$0xff]
        %v312 = vld [vmem:[%s237 + $0x90] sm:$0xff]
        %v313 = vld [vmem:[%s237 + $0x98] sm:$0xff]
        %v314 = vld [vmem:[%s237 + $0xa0] sm:$0xff]
        %v315 = vld [vmem:[%s237 + $0xa8] sm:$0xff]
        %v316 = vld [vmem:[%s237 + $0xb0] sm:$0xff]
        %v317 = vld [vmem:[%s237 + $0xb8] sm:$0xff]
        %v318 = vld [vmem:[%s237 + $0xc0] sm:$0xff]
        %v319 = vld [vmem:[%s237 + $0xc8] sm:$0xff]
        %v320 = vld [vmem:[%s237 + $0xd0] sm:$0xff]
        %v321 = vld [vmem:[%s237 + $0xd8] sm:$0xff]
        %v322 = vld [vmem:[%s237 + $0xe0] sm:$0xff]
        %v323 = vld [vmem:[%s237 + $0xe8] sm:$0xff]
        %v324 = vld [vmem:[%s237 + $0xf0] sm:$0xff]
        %v325 = vld [vmem:[%s237 + $0xf8] sm:$0xff]
        %v326 = vld [vmem:[%s237 + $0x100] sm:$0xff]
        %v327 = vld [vmem:[%s237 + $0x108] sm:$0xff]
        %v328 = vld [vmem:[%s237 + $0x110] sm:$0xff]
        %v329 = vld [vmem:[%s237 + $0x118] sm:$0xff]
        %v330 = vld [vmem:[%s237 + $0x120] sm:$0xff]
        %v331 = vld [vmem:[%s237 + $0x128] sm:$0xff]
        %v332 = vld [vmem:[%s237 + $0x130] sm:$0xff]
        %v333 = vld [vmem:[%s237 + $0x138] sm:$0xff]
        %v334 = vld [vmem:[%s237 + $0x140] sm:$0xff]
        %v335 = vld [vmem:[%s237 + $0x148] sm:$0xff]
        %v336 = vld [vmem:[%s237 + $0x150] sm:$0xff]
        %v337 = vld [vmem:[%s237 + $0x158] sm:$0xff]
        %v338 = vld [vmem:[%s237 + $0x160] sm:$0xff]
        %v339 = vld [vmem:[%s237 + $0x168] sm:$0xff]
        %v340 = vld [vmem:[%s237 + $0x170] sm:$0xff]
        %v341 = vld [vmem:[%s237 + $0x178] sm:$0xff]
        %v342 = vld [vmem:[%s237 + $0x180] sm:$0xff]
        %v343 = vld [vmem:[%s237 + $0x188] sm:$0xff]
        %v344 = vld [vmem:[%s237 + $0x190] sm:$0xff]
        %v345 = vld [vmem:[%s237 + $0x198] sm:$0xff]
        %v346 = vld [vmem:[%s237 + $0x1a0] sm:$0xff]
        %v347 = vld [vmem:[%s237 + $0x1a8] sm:$0xff]
        %v348 = vld [vmem:[%s237 + $0x1b0] sm:$0xff]
        %v349 = vld [vmem:[%s237 + $0x1b8] sm:$0xff]
        %v350 = vld [vmem:[%s237 + $0x1c0] sm:$0xff]
        %v351 = vld [vmem:[%s237 + $0x1c8] sm:$0xff]
        %v352 = vld [vmem:[%s237 + $0x1d0] sm:$0xff]
        %v353 = vld [vmem:[%s237 + $0x1d8] sm:$0xff]
        %v354 = vld [vmem:[%s237 + $0x1e0] sm:$0xff]
        %v355 = vld [vmem:[%s237 + $0x1e8] sm:$0xff]
        %v356 = vld [vmem:[%s237 + $0x1f0] sm:$0xff]
        %v357 = vld [vmem:[%s237 + $0x1f8] sm:$0xff]
        %v358 = vld [vmem:[%s237 + $0x200] sm:$0xff]
        %v359 = vld [vmem:[%s237 + $0x208] sm:$0xff]
        %v360 = vld [vmem:[%s237 + $0x210] sm:$0xff]
        %v361 = vld [vmem:[%s237 + $0x218] sm:$0xff]
        %v362 = vld [vmem:[%s237 + $0x220] sm:$0xff]
        %v363 = vld [vmem:[%s237 + $0x228] sm:$0xff]
        %v364 = vld [vmem:[%s237 + $0x230] sm:$0xff]
        %v365 = vld [vmem:[%s237 + $0x238] sm:$0xff]
        %v366 = vld [vmem:[%s237 + $0x240] sm:$0xff]
        %v367 = vld [vmem:[%s237 + $0x248] sm:$0xff]
        %v368 = vld [vmem:[%s237 + $0x250] sm:$0xff]
        %v369 = vld [vmem:[%s237 + $0x258] sm:$0xff]
        %v370 = vld [vmem:[%s237 + $0x260] sm:$0xff]
        %v371 = vld [vmem:[%s237 + $0x268] sm:$0xff]
        %v372 = vld [vmem:[%s237 + $0x270] sm:$0xff]
        %v373 = vld [vmem:[%s237 + $0x278] sm:$0xff]
        %v374 = vld [vmem:[%s237 + $0x280] sm:$0xff]
        %v375 = vld [vmem:[%s237 + $0x288] sm:$0xff]
        %v376 = vld [vmem:[%s237 + $0x290] sm:$0xff]
        %v377 = vld [vmem:[%s237 + $0x298] sm:$0xff]
        %v378 = vld [vmem:[%s237 + $0x2a0] sm:$0xff]
        %v379 = vld [vmem:[%s237 + $0x2a8] sm:$0xff]
        %v380 = vld [vmem:[%s237 + $0x2b0] sm:$0xff]
        %v381 = vld [vmem:[%s237 + $0x2b8] sm:$0xff]
        %v382 = vld [vmem:[%s237 + $0x2c0] sm:$0xff]
        %v383 = vld [vmem:[%s237 + $0x2c8] sm:$0xff]
        %v384 = vld [vmem:[%s237 + $0x2d0] sm:$0xff]
        %v385 = vld [vmem:[%s237 + $0x2d8] sm:$0xff]
        %v386 = vld [vmem:[%s237 + $0x2e0] sm:$0xff]
        %v387 = vld [vmem:[%s237 + $0x2e8] sm:$0xff]
        %v388 = vld [vmem:[%s237 + $0x2f0] sm:$0xff]
        %v389 = vld [vmem:[%s237 + $0x2f8] sm:$0xff]
        %v390 = vld [vmem:[%s237 + $0x300] sm:$0xff]
        %v391 = vld [vmem:[%s237 + $0x308] sm:$0xff]
        %v392 = vld [vmem:[%s237 + $0x310] sm:$0xff]
        %v393 = vld [vmem:[%s237 + $0x318] sm:$0xff]
        %v394 = vld [vmem:[%s237 + $0x320] sm:$0xff]
        %v395 = vld [vmem:[%s237 + $0x328] sm:$0xff]
        %v396 = vld [vmem:[%s237 + $0x330] sm:$0xff]
        %v397 = vld [vmem:[%s237 + $0x338] sm:$0xff]
        %v398 = vld [vmem:[%s237 + $0x340] sm:$0xff]
        %v399 = vld [vmem:[%s237 + $0x348] sm:$0xff]
        %v400 = vld [vmem:[%s237 + $0x350] sm:$0xff]
        %v401 = vld [vmem:[%s237 + $0x358] sm:$0xff]
        %v402 = vld [vmem:[%s237 + $0x360] sm:$0xff]
        %v403 = vld [vmem:[%s237 + $0x368] sm:$0xff]
        %v404 = vld [vmem:[%s237 + $0x370] sm:$0xff]
        %v405 = vld [vmem:[%s237 + $0x378] sm:$0xff]
        %v406 = vld [vmem:[%s237 + $0x380] sm:$0xff]
        %v407 = vld [vmem:[%s237 + $0x388] sm:$0xff]
        %v408 = vld [vmem:[%s237 + $0x390] sm:$0xff]
        %v409 = vld [vmem:[%s237 + $0x398] sm:$0xff]
        %v410 = vld [vmem:[%s237 + $0x3a0] sm:$0xff]
        %v411 = vld [vmem:[%s237 + $0x3a8] sm:$0xff]
        %v412 = vld [vmem:[%s237 + $0x3b0] sm:$0xff]
        %v413 = vld [vmem:[%s237 + $0x3b8] sm:$0xff]
        %v414 = vld [vmem:[%s237 + $0x3c0] sm:$0xff]
        %v415 = vld [vmem:[%s237 + $0x3c8] sm:$0xff]
        %v416 = vld [vmem:[%s237 + $0x3d0] sm:$0xff]
        %v417 = vld [vmem:[%s237 + $0x3d8] sm:$0xff]
        %v418 = vld [vmem:[%s237 + $0x3e0] sm:$0xff]
        %v419 = vld [vmem:[%s237 + $0x3e8] sm:$0xff]
        %v420 = vld [vmem:[%s237 + $0x3f0] sm:$0xff]
        %v421 = vld [vmem:[%s237 + $0x3f8] sm:$0xff]
        %v422 = vld [vmem:[%s237 + $0x400] sm:$0xff]
        %v423 = vld [vmem:[%s237 + $0x408] sm:$0xff]
        %v424 = vld [vmem:[%s237 + $0x410] sm:$0xff]
        %v425 = vld [vmem:[%s237 + $0x418] sm:$0xff]
        %v426 = vld [vmem:[%s237 + $0x420] sm:$0xff]
        %v427 = vld [vmem:[%s237 + $0x428] sm:$0xff]
        %v428 = vld [vmem:[%s237 + $0x430] sm:$0xff]
        %v429 = vld [vmem:[%s237 + $0x438] sm:$0xff]
        %v430 = vld [vmem:[%s237 + $0x440] sm:$0xff]
        %v431 = vld [vmem:[%s237 + $0x448] sm:$0xff]
        %v432 = vld [vmem:[%s237 + $0x450] sm:$0xff]
        %v433 = vld [vmem:[%s237 + $0x458] sm:$0xff]
        %v434 = vld [vmem:[%s237 + $0x460] sm:$0xff]
        %v435 = vld [vmem:[%s237 + $0x468] sm:$0xff]
        %v436 = vld [vmem:[%s237 + $0x470] sm:$0xff]
        %v437 = vld [vmem:[%s237 + $0x478] sm:$0xff]
        %v438 = vld [vmem:[%s237 + $0x480] sm:$0xff]
        %v439 = vld [vmem:[%s237 + $0x488] sm:$0xff]
        %v440 = vld [vmem:[%s237 + $0x490] sm:$0xff]
        %v441 = vld [vmem:[%s237 + $0x498] sm:$0xff]
        %v442 = vld [vmem:[%s237 + $0x4a0] sm:$0xff]
        %v443 = vld [vmem:[%s237 + $0x4a8] sm:$0xff]
        %v444 = vld [vmem:[%s237 + $0x4b0] sm:$0xff]
        %v445 = vld [vmem:[%s237 + $0x4b8] sm:$0xff]
        %v446 = vld [vmem:[%s237 + $0x4c0] sm:$0xff]
        %v447 = vld [vmem:[%s237 + $0x4c8] sm:$0xff]
        %v448 = vld [vmem:[%s237 + $0x4d0] sm:$0xff]
        %v449 = vld [vmem:[%s237 + $0x4d8] sm:$0xff]
        %v450 = vld [vmem:[%s237 + $0x4e0] sm:$0xff]
        %v451 = vld [vmem:[%s237 + $0x4e8] sm:$0xff]
        %v452 = vld [vmem:[%s237 + $0x4f0] sm:$0xff]
        %v453 = vld [vmem:[%s237 + $0x4f8] sm:$0xff]
        %v454 = vld [vmem:[%s237 + $0x500] sm:$0xff]
        %v455 = vld [vmem:[%s237 + $0x508] sm:$0xff]
        %v456 = vld [vmem:[%s237 + $0x510] sm:$0xff]
        %v457 = vld [vmem:[%s237 + $0x518] sm:$0xff]
        %v458 = vld [vmem:[%s237 + $0x520] sm:$0xff]
        %v459 = vld [vmem:[%s237 + $0x528] sm:$0xff]
        %v460 = vld [vmem:[%s237 + $0x530] sm:$0xff]
        %v461 = vld [vmem:[%s237 + $0x538] sm:$0xff]
        %v462 = vld [vmem:[%s237 + $0x540] sm:$0xff]
        %v463 = vld [vmem:[%s237 + $0x548] sm:$0xff]
        %v464 = vld [vmem:[%s237 + $0x550] sm:$0xff]
        %v465 = vld [vmem:[%s237 + $0x558] sm:$0xff]
        %v466 = vld [vmem:[%s237 + $0x560] sm:$0xff]
        %v467 = vld [vmem:[%s237 + $0x568] sm:$0xff]
        %v468 = vld [vmem:[%s237 + $0x570] sm:$0xff]
        %v469 = vld [vmem:[%s237 + $0x578] sm:$0xff]
        %v470 = vld [vmem:[%s237 + $0x580] sm:$0xff]
        %v471 = vld [vmem:[%s237 + $0x588] sm:$0xff]
        %v472 = vld [vmem:[%s237 + $0x590] sm:$0xff]
        %v473 = vld [vmem:[%s237 + $0x598] sm:$0xff]
        %v474 = vld [vmem:[%s237 + $0x5a0] sm:$0xff]
        %v475 = vld [vmem:[%s237 + $0x5a8] sm:$0xff]
        %v476 = vld [vmem:[%s237 + $0x5b0] sm:$0xff]
        %v477 = vld [vmem:[%s237 + $0x5b8] sm:$0xff]
        %v478 = vld [vmem:[%s237 + $0x5c0] sm:$0xff]
        %v479 = vld [vmem:[%s237 + $0x5c8] sm:$0xff]
        %v480 = vld [vmem:[%s237 + $0x5d0] sm:$0xff]
        %v481 = vld [vmem:[%s237 + $0x5d8] sm:$0xff]
        %v482 = vld [vmem:[%s237 + $0x5e0] sm:$0xff]
        %v483 = vld [vmem:[%s237 + $0x5e8] sm:$0xff]
        %v484 = vld [vmem:[%s237 + $0x5f0] sm:$0xff]
        %v485 = vld [vmem:[%s237 + $0x5f8] sm:$0xff]
        %v486 = vld [vmem:[%s285] sm:$0xff]
        %v487 = vld [vmem:[%s285 + $0x8] sm:$0xff]
        %v488 = vld [vmem:[%s285 + $0x10] sm:$0xff]
        %v489 = vld [vmem:[%s285 + $0x18] sm:$0xff]
        %v490 = vld [vmem:[%s285 + $0x20] sm:$0xff]
        %v491 = vld [vmem:[%s285 + $0x28] sm:$0xff]
        %v492 = vld [vmem:[%s285 + $0x30] sm:$0xff]
        %v493 = vld [vmem:[%s285 + $0x38] sm:$0xff]
        %v494 = vld [vmem:[%s285 + $0x40] sm:$0xff]
        %v495 = vld [vmem:[%s285 + $0x48] sm:$0xff]
        %v496 = vld [vmem:[%s285 + $0x50] sm:$0xff]
        %v497 = vld [vmem:[%s285 + $0x58] sm:$0xff]
        %v498 = vld [vmem:[%s285 + $0x60] sm:$0xff]
        %v499 = vld [vmem:[%s285 + $0x68] sm:$0xff]
        %v500 = vld [vmem:[%s285 + $0x70] sm:$0xff]
        %v501 = vld [vmem:[%s285 + $0x78] sm:$0xff]
        %v502 = vld [vmem:[%s285 + $0x80] sm:$0xff]
        %v503 = vld [vmem:[%s285 + $0x88] sm:$0xff]
        %v504 = vld [vmem:[%s285 + $0x90] sm:$0xff]
        %v505 = vld [vmem:[%s285 + $0x98] sm:$0xff]
        %v506 = vld [vmem:[%s285 + $0xa0] sm:$0xff]
        %v507 = vld [vmem:[%s285 + $0xa8] sm:$0xff]
        %v508 = vld [vmem:[%s285 + $0xb0] sm:$0xff]
        %v509 = vld [vmem:[%s285 + $0xb8] sm:$0xff]
        %v510 = vld [vmem:[%s285 + $0xc0] sm:$0xff]
        %v511 = vld [vmem:[%s285 + $0xc8] sm:$0xff]
        %v512 = vld [vmem:[%s285 + $0xd0] sm:$0xff]
        %v513 = vld [vmem:[%s285 + $0xd8] sm:$0xff]
        %v514 = vld [vmem:[%s285 + $0xe0] sm:$0xff]
        %v515 = vld [vmem:[%s285 + $0xe8] sm:$0xff]
        %v516 = vld [vmem:[%s285 + $0xf0] sm:$0xff]
        %v517 = vld [vmem:[%s285 + $0xf8] sm:$0xff]
        %v518 = vld [vmem:[%s285 + $0x100] sm:$0xff]
        %v519 = vld [vmem:[%s285 + $0x108] sm:$0xff]
        %v520 = vld [vmem:[%s285 + $0x110] sm:$0xff]
        %v521 = vld [vmem:[%s285 + $0x118] sm:$0xff]
        %v522 = vld [vmem:[%s285 + $0x120] sm:$0xff]
        %v523 = vld [vmem:[%s285 + $0x128] sm:$0xff]
        %v524 = vld [vmem:[%s285 + $0x130] sm:$0xff]
        %v525 = vld [vmem:[%s285 + $0x138] sm:$0xff]
        %v526 = vld [vmem:[%s285 + $0x140] sm:$0xff]
        %v527 = vld [vmem:[%s285 + $0x148] sm:$0xff]
        %v528 = vld [vmem:[%s285 + $0x150] sm:$0xff]
        %v529 = vld [vmem:[%s285 + $0x158] sm:$0xff]
        %v530 = vld [vmem:[%s285 + $0x160] sm:$0xff]
        %v531 = vld [vmem:[%s285 + $0x168] sm:$0xff]
        %v532 = vld [vmem:[%s285 + $0x170] sm:$0xff]
        %v533 = vld [vmem:[%s285 + $0x178] sm:$0xff]
        %v534 = vld [vmem:[%s285 + $0x180] sm:$0xff]
        %v535 = vld [vmem:[%s285 + $0x188] sm:$0xff]
        %v536 = vld [vmem:[%s285 + $0x190] sm:$0xff]
        %v537 = vld [vmem:[%s285 + $0x198] sm:$0xff]
        %v538 = vld [vmem:[%s285 + $0x1a0] sm:$0xff]
        %v539 = vld [vmem:[%s285 + $0x1a8] sm:$0xff]
        %v540 = vld [vmem:[%s285 + $0x1b0] sm:$0xff]
        %v541 = vld [vmem:[%s285 + $0x1b8] sm:$0xff]
        %v542 = vld [vmem:[%s285 + $0x1c0] sm:$0xff]
        %v543 = vld [vmem:[%s285 + $0x1c8] sm:$0xff]
        %v544 = vld [vmem:[%s285 + $0x1d0] sm:$0xff]
        %v545 = vld [vmem:[%s285 + $0x1d8] sm:$0xff]
        %v546 = vld [vmem:[%s285 + $0x1e0] sm:$0xff]
        %v547 = vld [vmem:[%s285 + $0x1e8] sm:$0xff]
        %v548 = vld [vmem:[%s285 + $0x1f0] sm:$0xff]
        %v549 = vld [vmem:[%s285 + $0x1f8] sm:$0xff]
        %v550 = vld [vmem:[%s285 + $0x200] sm:$0xff]
        %v551 = vld [vmem:[%s285 + $0x208] sm:$0xff]
        %v552 = vld [vmem:[%s285 + $0x210] sm:$0xff]
        %v553 = vld [vmem:[%s285 + $0x218] sm:$0xff]
        %v554 = vld [vmem:[%s285 + $0x220] sm:$0xff]
        %v555 = vld [vmem:[%s285 + $0x228] sm:$0xff]
        %v556 = vld [vmem:[%s285 + $0x230] sm:$0xff]
        %v557 = vld [vmem:[%s285 + $0x238] sm:$0xff]
        %v558 = vld [vmem:[%s285 + $0x240] sm:$0xff]
        %v559 = vld [vmem:[%s285 + $0x248] sm:$0xff]
        %v560 = vld [vmem:[%s285 + $0x250] sm:$0xff]
        %v561 = vld [vmem:[%s285 + $0x258] sm:$0xff]
        %v562 = vld [vmem:[%s285 + $0x260] sm:$0xff]
        %v563 = vld [vmem:[%s285 + $0x268] sm:$0xff]
        %v564 = vld [vmem:[%s285 + $0x270] sm:$0xff]
        %v565 = vld [vmem:[%s285 + $0x278] sm:$0xff]
        %v566 = vld [vmem:[%s285 + $0x280] sm:$0xff]
        %v567 = vld [vmem:[%s285 + $0x288] sm:$0xff]
        %v568 = vld [vmem:[%s285 + $0x290] sm:$0xff]
        %v569 = vld [vmem:[%s285 + $0x298] sm:$0xff]
        %v570 = vld [vmem:[%s285 + $0x2a0] sm:$0xff]
        %v571 = vld [vmem:[%s285 + $0x2a8] sm:$0xff]
        %v572 = vld [vmem:[%s285 + $0x2b0] sm:$0xff]
        %v573 = vld [vmem:[%s285 + $0x2b8] sm:$0xff]
        %v574 = vld [vmem:[%s285 + $0x2c0] sm:$0xff]
        %v575 = vld [vmem:[%s285 + $0x2c8] sm:$0xff]
        %v576 = vld [vmem:[%s285 + $0x2d0] sm:$0xff]
        %v577 = vld [vmem:[%s285 + $0x2d8] sm:$0xff]
        %v578 = vld [vmem:[%s285 + $0x2e0] sm:$0xff]
        %v579 = vld [vmem:[%s285 + $0x2e8] sm:$0xff]
        %v580 = vld [vmem:[%s285 + $0x2f0] sm:$0xff]
        %v581 = vld [vmem:[%s285 + $0x2f8] sm:$0xff]
        %v582 = vadd.f32 %v294, %v486
        %v583 = vadd.f32 %v295, %v487
        %v584 = vadd.f32 %v296, %v488
        %v585 = vadd.f32 %v297, %v489
        %v586 = vadd.f32 %v298, %v490
        %v587 = vadd.f32 %v299, %v491
        %v588 = vadd.f32 %v300, %v492
        %v589 = vadd.f32 %v301, %v493
        %v590 = vadd.f32 %v302, %v494
        %v591 = vadd.f32 %v303, %v495
        %v592 = vadd.f32 %v304, %v496
        %v593 = vadd.f32 %v305, %v497
        %v594 = vadd.f32 %v306, %v498
        %v595 = vadd.f32 %v307, %v499
        %v596 = vadd.f32 %v308, %v500
        %v597 = vadd.f32 %v309, %v501
        %v598 = vadd.f32 %v310, %v502
        %v599 = vadd.f32 %v311, %v503
        %v600 = vadd.f32 %v312, %v504
        %v601 = vadd.f32 %v313, %v505
        %v602 = vadd.f32 %v314, %v506
        %v603 = vadd.f32 %v315, %v507
        %v604 = vadd.f32 %v316, %v508
        %v605 = vadd.f32 %v317, %v509
        %v606 = vadd.f32 %v318, %v510
        %v607 = vadd.f32 %v319, %v511
        %v608 = vadd.f32 %v320, %v512
        %v609 = vadd.f32 %v321, %v513
        %v610 = vadd.f32 %v322, %v514
        %v611 = vadd.f32 %v323, %v515
        %v612 = vadd.f32 %v324, %v516
        %v613 = vadd.f32 %v325, %v517
        %v614 = vadd.f32 %v326, %v518
        %v615 = vadd.f32 %v327, %v519
        %v616 = vadd.f32 %v328, %v520
        %v617 = vadd.f32 %v329, %v521
        %v618 = vadd.f32 %v330, %v522
        %v619 = vadd.f32 %v331, %v523
        %v620 = vadd.f32 %v332, %v524
        %v621 = vadd.f32 %v333, %v525
        %v622 = vadd.f32 %v334, %v526
        %v623 = vadd.f32 %v335, %v527
        %v624 = vadd.f32 %v336, %v528
        %v625 = vadd.f32 %v337, %v529
        %v626 = vadd.f32 %v338, %v530
        %v627 = vadd.f32 %v339, %v531
        %v628 = vadd.f32 %v340, %v532
        %v629 = vadd.f32 %v341, %v533
        %v630 = vadd.f32 %v342, %v534
        %v631 = vadd.f32 %v343, %v535
        %v632 = vadd.f32 %v344, %v536
        %v633 = vadd.f32 %v345, %v537
        %v634 = vadd.f32 %v346, %v538
        %v635 = vadd.f32 %v347, %v539
        %v636 = vadd.f32 %v348, %v540
        %v637 = vadd.f32 %v349, %v541
        %v638 = vadd.f32 %v350, %v542
        %v639 = vadd.f32 %v351, %v543
        %v640 = vadd.f32 %v352, %v544
        %v641 = vadd.f32 %v353, %v545
        %v642 = vadd.f32 %v354, %v546
        %v643 = vadd.f32 %v355, %v547
        %v644 = vadd.f32 %v356, %v548
        %v645 = vadd.f32 %v357, %v549
        %v646 = vadd.f32 %v358, %v550
        %v647 = vadd.f32 %v359, %v551
        %v648 = vadd.f32 %v360, %v552
        %v649 = vadd.f32 %v361, %v553
        %v650 = vadd.f32 %v362, %v554
        %v651 = vadd.f32 %v363, %v555
        %v652 = vadd.f32 %v364, %v556
        %v653 = vadd.f32 %v365, %v557
        %v654 = vadd.f32 %v366, %v558
        %v655 = vadd.f32 %v367, %v559
        %v656 = vadd.f32 %v368, %v560
        %v657 = vadd.f32 %v369, %v561
        %v658 = vadd.f32 %v370, %v562
        %v659 = vadd.f32 %v371, %v563
        %v660 = vadd.f32 %v372, %v564
        %v661 = vadd.f32 %v373, %v565
        %v662 = vadd.f32 %v374, %v566
        %v663 = vadd.f32 %v375, %v567
        %v664 = vadd.f32 %v376, %v568
        %v665 = vadd.f32 %v377, %v569
        %v666 = vadd.f32 %v378, %v570
        %v667 = vadd.f32 %v379, %v571
        %v668 = vadd.f32 %v380, %v572
        %v669 = vadd.f32 %v381, %v573
        %v670 = vadd.f32 %v382, %v574
        %v671 = vadd.f32 %v383, %v575
        %v672 = vadd.f32 %v384, %v576
        %v673 = vadd.f32 %v385, %v577
        %v674 = vadd.f32 %v386, %v578
        %v675 = vadd.f32 %v387, %v579
        %v676 = vadd.f32 %v388, %v580
        %v677 = vadd.f32 %v389, %v581
        %v678 = vadd.f32 %v390, %v486
        %v679 = vadd.f32 %v391, %v487
        %v680 = vadd.f32 %v392, %v488
        %v681 = vadd.f32 %v393, %v489
        %v682 = vadd.f32 %v394, %v490
        %v683 = vadd.f32 %v395, %v491
        %v684 = vadd.f32 %v396, %v492
        %v685 = vadd.f32 %v397, %v493
        %v686 = vadd.f32 %v398, %v494
        %v687 = vadd.f32 %v399, %v495
        %v688 = vadd.f32 %v400, %v496
        %v689 = vadd.f32 %v401, %v497
        %v690 = vadd.f32 %v402, %v498
        %v691 = vadd.f32 %v403, %v499
        %v692 = vadd.f32 %v404, %v500
        %v693 = vadd.f32 %v405, %v501
        %v694 = vadd.f32 %v406, %v502
        %v695 = vadd.f32 %v407, %v503
        %v696 = vadd.f32 %v408, %v504
        %v697 = vadd.f32 %v409, %v505
        %v698 = vadd.f32 %v410, %v506
        %v699 = vadd.f32 %v411, %v507
        %v700 = vadd.f32 %v412, %v508
        %v701 = vadd.f32 %v413, %v509
        %v702 = vadd.f32 %v414, %v510
        %v703 = vadd.f32 %v415, %v511
        %v704 = vadd.f32 %v416, %v512
        %v705 = vadd.f32 %v417, %v513
        %v706 = vadd.f32 %v418, %v514
        %v707 = vadd.f32 %v419, %v515
        %v708 = vadd.f32 %v420, %v516
        %v709 = vadd.f32 %v421, %v517
        %v710 = vadd.f32 %v422, %v518
        %v711 = vadd.f32 %v423, %v519
        %v712 = vadd.f32 %v424, %v520
        %v713 = vadd.f32 %v425, %v521
        %v714 = vadd.f32 %v426, %v522
        %v715 = vadd.f32 %v427, %v523
        %v716 = vadd.f32 %v428, %v524
        %v717 = vadd.f32 %v429, %v525
        %v718 = vadd.f32 %v430, %v526
        %v719 = vadd.f32 %v431, %v527
        %v720 = vadd.f32 %v432, %v528
        %v721 = vadd.f32 %v433, %v529
        %v722 = vadd.f32 %v434, %v530
        %v723 = vadd.f32 %v435, %v531
        %v724 = vadd.f32 %v436, %v532
        %v725 = vadd.f32 %v437, %v533
        %v726 = vadd.f32 %v438, %v534
        %v727 = vadd.f32 %v439, %v535
        %v728 = vadd.f32 %v440, %v536
        %v729 = vadd.f32 %v441, %v537
        %v730 = vadd.f32 %v442, %v538
        %v731 = vadd.f32 %v443, %v539
        %v732 = vadd.f32 %v444, %v540
        %v733 = vadd.f32 %v445, %v541
        %v734 = vadd.f32 %v446, %v542
        %v735 = vadd.f32 %v447, %v543
        %v736 = vadd.f32 %v448, %v544
        %v737 = vadd.f32 %v449, %v545
        %v738 = vadd.f32 %v450, %v546
        %v739 = vadd.f32 %v451, %v547
        %v740 = vadd.f32 %v452, %v548
        %v741 = vadd.f32 %v453, %v549
        %v742 = vadd.f32 %v454, %v550
        %v743 = vadd.f32 %v455, %v551
        %v744 = vadd.f32 %v456, %v552
        %v745 = vadd.f32 %v457, %v553
        %v746 = vadd.f32 %v458, %v554
        %v747 = vadd.f32 %v459, %v555
        %v748 = vadd.f32 %v460, %v556
        %v749 = vadd.f32 %v461, %v557
        %v750 = vadd.f32 %v462, %v558
        %v751 = vadd.f32 %v463, %v559
        %v752 = vadd.f32 %v464, %v560
        %v753 = vadd.f32 %v465, %v561
        %v754 = vadd.f32 %v466, %v562
        %v755 = vadd.f32 %v467, %v563
        %v756 = vadd.f32 %v468, %v564
        %v757 = vadd.f32 %v469, %v565
        %v758 = vadd.f32 %v470, %v566
        %v759 = vadd.f32 %v471, %v567
        %v760 = vadd.f32 %v472, %v568
        %v761 = vadd.f32 %v473, %v569
        %v762 = vadd.f32 %v474, %v570
        %v763 = vadd.f32 %v475, %v571
        %v764 = vadd.f32 %v476, %v572
        %v765 = vadd.f32 %v477, %v573
        %v766 = vadd.f32 %v478, %v574
        %v767 = vadd.f32 %v479, %v575
        %v768 = vadd.f32 %v480, %v576
        %v769 = vadd.f32 %v481, %v577
        %v770 = vadd.f32 %v482, %v578
        %v771 = vadd.f32 %v483, %v579
        %v772 = vadd.f32 %v484, %v580
        %v773 = vadd.f32 %v485, %v581
        %774 = vst [vmem:[%s271] sm:$0xff] %v582
        %775 = vst [vmem:[%s271 + $0x8] sm:$0xff] %v583
        %776 = vst [vmem:[%s271 + $0x10] sm:$0xff] %v584
        %777 = vst [vmem:[%s271 + $0x18] sm:$0xff] %v585
        %778 = vst [vmem:[%s271 + $0x20] sm:$0xff] %v586
        %779 = vst [vmem:[%s271 + $0x28] sm:$0xff] %v587
        %780 = vst [vmem:[%s271 + $0x30] sm:$0xff] %v588
        %781 = vst [vmem:[%s271 + $0x38] sm:$0xff] %v589
        %782 = vst [vmem:[%s271 + $0x40] sm:$0xff] %v590
        %783 = vst [vmem:[%s271 + $0x48] sm:$0xff] %v591
        %784 = vst [vmem:[%s271 + $0x50] sm:$0xff] %v592
        %785 = vst [vmem:[%s271 + $0x58] sm:$0xff] %v593
        %786 = vst [vmem:[%s271 + $0x60] sm:$0xff] %v594
        %787 = vst [vmem:[%s271 + $0x68] sm:$0xff] %v595
        %788 = vst [vmem:[%s271 + $0x70] sm:$0xff] %v596
        %789 = vst [vmem:[%s271 + $0x78] sm:$0xff] %v597
        %790 = vst [vmem:[%s271 + $0x80] sm:$0xff] %v598
        %791 = vst [vmem:[%s271 + $0x88] sm:$0xff] %v599
        %792 = vst [vmem:[%s271 + $0x90] sm:$0xff] %v600
        %793 = vst [vmem:[%s271 + $0x98] sm:$0xff] %v601
        %794 = vst [vmem:[%s271 + $0xa0] sm:$0xff] %v602
        %795 = vst [vmem:[%s271 + $0xa8] sm:$0xff] %v603
        %796 = vst [vmem:[%s271 + $0xb0] sm:$0xff] %v604
        %797 = vst [vmem:[%s271 + $0xb8] sm:$0xff] %v605
        %798 = vst [vmem:[%s271 + $0xc0] sm:$0xff] %v606
        %799 = vst [vmem:[%s271 + $0xc8] sm:$0xff] %v607
        %800 = vst [vmem:[%s271 + $0xd0] sm:$0xff] %v608
        %801 = vst [vmem:[%s271 + $0xd8] sm:$0xff] %v609
        %802 = vst [vmem:[%s271 + $0xe0] sm:$0xff] %v610
        %803 = vst [vmem:[%s271 + $0xe8] sm:$0xff] %v611
        %804 = vst [vmem:[%s271 + $0xf0] sm:$0xff] %v612
        %805 = vst [vmem:[%s271 + $0xf8] sm:$0xff] %v613
        %806 = vst [vmem:[%s271 + $0x100] sm:$0xff] %v614
        %807 = vst [vmem:[%s271 + $0x108] sm:$0xff] %v615
        %808 = vst [vmem:[%s271 + $0x110] sm:$0xff] %v616
        %809 = vst [vmem:[%s271 + $0x118] sm:$0xff] %v617
        %810 = vst [vmem:[%s271 + $0x120] sm:$0xff] %v618
        %811 = vst [vmem:[%s271 + $0x128] sm:$0xff] %v619
        %812 = vst [vmem:[%s271 + $0x130] sm:$0xff] %v620
        %813 = vst [vmem:[%s271 + $0x138] sm:$0xff] %v621
        %814 = vst [vmem:[%s271 + $0x140] sm:$0xff] %v622
        %815 = vst [vmem:[%s271 + $0x148] sm:$0xff] %v623
        %816 = vst [vmem:[%s271 + $0x150] sm:$0xff] %v624
        %817 = vst [vmem:[%s271 + $0x158] sm:$0xff] %v625
        %818 = vst [vmem:[%s271 + $0x160] sm:$0xff] %v626
        %819 = vst [vmem:[%s271 + $0x168] sm:$0xff] %v627
        %820 = vst [vmem:[%s271 + $0x170] sm:$0xff] %v628
        %821 = vst [vmem:[%s271 + $0x178] sm:$0xff] %v629
        %822 = vst [vmem:[%s271 + $0x180] sm:$0xff] %v630
        %823 = vst [vmem:[%s271 + $0x188] sm:$0xff] %v631
        %824 = vst [vmem:[%s271 + $0x190] sm:$0xff] %v632
        %825 = vst [vmem:[%s271 + $0x198] sm:$0xff] %v633
        %826 = vst [vmem:[%s271 + $0x1a0] sm:$0xff] %v634
        %827 = vst [vmem:[%s271 + $0x1a8] sm:$0xff] %v635
        %828 = vst [vmem:[%s271 + $0x1b0] sm:$0xff] %v636
        %829 = vst [vmem:[%s271 + $0x1b8] sm:$0xff] %v637
        %830 = vst [vmem:[%s271 + $0x1c0] sm:$0xff] %v638
        %831 = vst [vmem:[%s271 + $0x1c8] sm:$0xff] %v639
        %832 = vst [vmem:[%s271 + $0x1d0] sm:$0xff] %v640
        %833 = vst [vmem:[%s271 + $0x1d8] sm:$0xff] %v641
        %834 = vst [vmem:[%s271 + $0x1e0] sm:$0xff] %v642
        %835 = vst [vmem:[%s271 + $0x1e8] sm:$0xff] %v643
        %836 = vst [vmem:[%s271 + $0x1f0] sm:$0xff] %v644
        %837 = vst [vmem:[%s271 + $0x1f8] sm:$0xff] %v645
        %838 = vst [vmem:[%s271 + $0x200] sm:$0xff] %v646
        %839 = vst [vmem:[%s271 + $0x208] sm:$0xff] %v647
        %840 = vst [vmem:[%s271 + $0x210] sm:$0xff] %v648
        %841 = vst [vmem:[%s271 + $0x218] sm:$0xff] %v649
        %842 = vst [vmem:[%s271 + $0x220] sm:$0xff] %v650
        %843 = vst [vmem:[%s271 + $0x228] sm:$0xff] %v651
        %844 = vst [vmem:[%s271 + $0x230] sm:$0xff] %v652
        %845 = vst [vmem:[%s271 + $0x238] sm:$0xff] %v653
        %846 = vst [vmem:[%s271 + $0x240] sm:$0xff] %v654
        %847 = vst [vmem:[%s271 + $0x248] sm:$0xff] %v655
        %848 = vst [vmem:[%s271 + $0x250] sm:$0xff] %v656
        %849 = vst [vmem:[%s271 + $0x258] sm:$0xff] %v657
        %850 = vst [vmem:[%s271 + $0x260] sm:$0xff] %v658
        %851 = vst [vmem:[%s271 + $0x268] sm:$0xff] %v659
        %852 = vst [vmem:[%s271 + $0x270] sm:$0xff] %v660
        %853 = vst [vmem:[%s271 + $0x278] sm:$0xff] %v661
        %854 = vst [vmem:[%s271 + $0x280] sm:$0xff] %v662
        %855 = vst [vmem:[%s271 + $0x288] sm:$0xff] %v663
        %856 = vst [vmem:[%s271 + $0x290] sm:$0xff] %v664
        %857 = vst [vmem:[%s271 + $0x298] sm:$0xff] %v665
        %858 = vst [vmem:[%s271 + $0x2a0] sm:$0xff] %v666
        %859 = vst [vmem:[%s271 + $0x2a8] sm:$0xff] %v667
        %860 = vst [vmem:[%s271 + $0x2b0] sm:$0xff] %v668
        %861 = vst [vmem:[%s271 + $0x2b8] sm:$0xff] %v669
        %862 = vst [vmem:[%s271 + $0x2c0] sm:$0xff] %v670
        %863 = vst [vmem:[%s271 + $0x2c8] sm:$0xff] %v671
        %864 = vst [vmem:[%s271 + $0x2d0] sm:$0xff] %v672
        %865 = vst [vmem:[%s271 + $0x2d8] sm:$0xff] %v673
        %866 = vst [vmem:[%s271 + $0x2e0] sm:$0xff] %v674
        %867 = vst [vmem:[%s271 + $0x2e8] sm:$0xff] %v675
        %868 = vst [vmem:[%s271 + $0x2f0] sm:$0xff] %v676
        %869 = vst [vmem:[%s271 + $0x2f8] sm:$0xff] %v677
        %870 = vst [vmem:[%s271 + $0x300] sm:$0xff] %v678
        %871 = vst [vmem:[%s271 + $0x308] sm:$0xff] %v679
        %872 = vst [vmem:[%s271 + $0x310] sm:$0xff] %v680
        %873 = vst [vmem:[%s271 + $0x318] sm:$0xff] %v681
        %874 = vst [vmem:[%s271 + $0x320] sm:$0xff] %v682
        %875 = vst [vmem:[%s271 + $0x328] sm:$0xff] %v683
        %876 = vst [vmem:[%s271 + $0x330] sm:$0xff] %v684
        %877 = vst [vmem:[%s271 + $0x338] sm:$0xff] %v685
        %878 = vst [vmem:[%s271 + $0x340] sm:$0xff] %v686
        %879 = vst [vmem:[%s271 + $0x348] sm:$0xff] %v687
        %880 = vst [vmem:[%s271 + $0x350] sm:$0xff] %v688
        %881 = vst [vmem:[%s271 + $0x358] sm:$0xff] %v689
        %882 = vst [vmem:[%s271 + $0x360] sm:$0xff] %v690
        %883 = vst [vmem:[%s271 + $0x368] sm:$0xff] %v691
        %884 = vst [vmem:[%s271 + $0x370] sm:$0xff] %v692
        %885 = vst [vmem:[%s271 + $0x378] sm:$0xff] %v693
        %886 = vst [vmem:[%s271 + $0x380] sm:$0xff] %v694
        %887 = vst [vmem:[%s271 + $0x388] sm:$0xff] %v695
        %888 = vst [vmem:[%s271 + $0x390] sm:$0xff] %v696
        %889 = vst [vmem:[%s271 + $0x398] sm:$0xff] %v697
        %890 = vst [vmem:[%s271 + $0x3a0] sm:$0xff] %v698
        %891 = vst [vmem:[%s271 + $0x3a8] sm:$0xff] %v699
        %892 = vst [vmem:[%s271 + $0x3b0] sm:$0xff] %v700
        %893 = vst [vmem:[%s271 + $0x3b8] sm:$0xff] %v701
        %894 = vst [vmem:[%s271 + $0x3c0] sm:$0xff] %v702
        %895 = vst [vmem:[%s271 + $0x3c8] sm:$0xff] %v703
        %896 = vst [vmem:[%s271 + $0x3d0] sm:$0xff] %v704
        %897 = vst [vmem:[%s271 + $0x3d8] sm:$0xff] %v705
        %898 = vst [vmem:[%s271 + $0x3e0] sm:$0xff] %v706
        %899 = vst [vmem:[%s271 + $0x3e8] sm:$0xff] %v707
        %900 = vst [vmem:[%s271 + $0x3f0] sm:$0xff] %v708
        %901 = vst [vmem:[%s271 + $0x3f8] sm:$0xff] %v709
        %902 = vst [vmem:[%s271 + $0x400] sm:$0xff] %v710
        %903 = vst [vmem:[%s271 + $0x408] sm:$0xff] %v711
        %904 = vst [vmem:[%s271 + $0x410] sm:$0xff] %v712
        %905 = vst [vmem:[%s271 + $0x418] sm:$0xff] %v713
        %906 = vst [vmem:[%s271 + $0x420] sm:$0xff] %v714
        %907 = vst [vmem:[%s271 + $0x428] sm:$0xff] %v715
        %908 = vst [vmem:[%s271 + $0x430] sm:$0xff] %v716
        %909 = vst [vmem:[%s271 + $0x438] sm:$0xff] %v717
        %910 = vst [vmem:[%s271 + $0x440] sm:$0xff] %v718
        %911 = vst [vmem:[%s271 + $0x448] sm:$0xff] %v719
        %912 = vst [vmem:[%s271 + $0x450] sm:$0xff] %v720
        %913 = vst [vmem:[%s271 + $0x458] sm:$0xff] %v721
        %914 = vst [vmem:[%s271 + $0x460] sm:$0xff] %v722
        %915 = vst [vmem:[%s271 + $0x468] sm:$0xff] %v723
        %916 = vst [vmem:[%s271 + $0x470] sm:$0xff] %v724
        %917 = vst [vmem:[%s271 + $0x478] sm:$0xff] %v725
        %918 = vst [vmem:[%s271 + $0x480] sm:$0xff] %v726
        %919 = vst [vmem:[%s271 + $0x488] sm:$0xff] %v727
        %920 = vst [vmem:[%s271 + $0x490] sm:$0xff] %v728
        %921 = vst [vmem:[%s271 + $0x498] sm:$0xff] %v729
        %922 = vst [vmem:[%s271 + $0x4a0] sm:$0xff] %v730
        %923 = vst [vmem:[%s271 + $0x4a8] sm:$0xff] %v731
        %924 = vst [vmem:[%s271 + $0x4b0] sm:$0xff] %v732
        %925 = vst [vmem:[%s271 + $0x4b8] sm:$0xff] %v733
        %926 = vst [vmem:[%s271 + $0x4c0] sm:$0xff] %v734
        %927 = vst [vmem:[%s271 + $0x4c8] sm:$0xff] %v735
        %928 = vst [vmem:[%s271 + $0x4d0] sm:$0xff] %v736
        %929 = vst [vmem:[%s271 + $0x4d8] sm:$0xff] %v737
        %930 = vst [vmem:[%s271 + $0x4e0] sm:$0xff] %v738
        %931 = vst [vmem:[%s271 + $0x4e8] sm:$0xff] %v739
        %932 = vst [vmem:[%s271 + $0x4f0] sm:$0xff] %v740
        %933 = vst [vmem:[%s271 + $0x4f8] sm:$0xff] %v741
        %934 = vst [vmem:[%s271 + $0x500] sm:$0xff] %v742
        %935 = vst [vmem:[%s271 + $0x508] sm:$0xff] %v743
        %936 = vst [vmem:[%s271 + $0x510] sm:$0xff] %v744
        %937 = vst [vmem:[%s271 + $0x518] sm:$0xff] %v745
        %938 = vst [vmem:[%s271 + $0x520] sm:$0xff] %v746
        %939 = vst [vmem:[%s271 + $0x528] sm:$0xff] %v747
        %940 = vst [vmem:[%s271 + $0x530] sm:$0xff] %v748
        %941 = vst [vmem:[%s271 + $0x538] sm:$0xff] %v749
        %942 = vst [vmem:[%s271 + $0x540] sm:$0xff] %v750
        %943 = vst [vmem:[%s271 + $0x548] sm:$0xff] %v751
        %944 = vst [vmem:[%s271 + $0x550] sm:$0xff] %v752
        %945 = vst [vmem:[%s271 + $0x558] sm:$0xff] %v753
        %946 = vst [vmem:[%s271 + $0x560] sm:$0xff] %v754
        %947 = vst [vmem:[%s271 + $0x568] sm:$0xff] %v755
        %948 = vst [vmem:[%s271 + $0x570] sm:$0xff] %v756
        %949 = vst [vmem:[%s271 + $0x578] sm:$0xff] %v757
        %950 = vst [vmem:[%s271 + $0x580] sm:$0xff] %v758
        %951 = vst [vmem:[%s271 + $0x588] sm:$0xff] %v759
        %952 = vst [vmem:[%s271 + $0x590] sm:$0xff] %v760
        %953 = vst [vmem:[%s271 + $0x598] sm:$0xff] %v761
        %954 = vst [vmem:[%s271 + $0x5a0] sm:$0xff] %v762
        %955 = vst [vmem:[%s271 + $0x5a8] sm:$0xff] %v763
        %956 = vst [vmem:[%s271 + $0x5b0] sm:$0xff] %v764
        %957 = vst [vmem:[%s271 + $0x5b8] sm:$0xff] %v765
        %958 = vst [vmem:[%s271 + $0x5c0] sm:$0xff] %v766
        %959 = vst [vmem:[%s271 + $0x5c8] sm:$0xff] %v767
        %960 = vst [vmem:[%s271 + $0x5d0] sm:$0xff] %v768
        %961 = vst [vmem:[%s271 + $0x5d8] sm:$0xff] %v769
        %962 = vst [vmem:[%s271 + $0x5e0] sm:$0xff] %v770
        %963 = vst [vmem:[%s271 + $0x5e8] sm:$0xff] %v771
        %964 = vst [vmem:[%s271 + $0x5f0] sm:$0xff] %v772
        %965 = vst [vmem:[%s271 + $0x5f8] sm:$0xff] %v773
        %s966 = sand.u32 %s121, 1
        %s967 = scalar_lea.sflag [#allocation4], %s966
        %s968 = sand.u32 %s121, 1
        %s969 = smul.addr %s968, 1536
        %s970 = scalar_lea.vmem [#allocation5], %s969
        // Predicated region
        $region33: #{relative_position_bias.1} parent=27 // pred_check
          %p971 = pneg %p131
        $region34: #{relative_position_bias.1} parent=27 // pred_check_branch
          %973 = sbr.rel (%p971) target = $region36
        $region35: #{relative_position_bias.1} parent=27 // pred_region
          #allocation9 [shape = 'u32[6]{0}', space=smem, size = 0x18, scoped, tag = 'DMA stride descriptor']
          %s974 = smul.u32 2, %s28
          %s975 = smul.u32 32, %s26
          %s976 = smul.u32 3, %s27
          %s978 = ssub.s32 24576, 24576
          %979 = vsyncadd %s967, %s978
          %s980 = smul.addr %s975, 3
          %s981 = sadd.s32 %s976, %s980
          %s982 = smul.addr %s25, 96
          %s983 = sadd.s32 %s981, %s982
          %s984 = smul.addr %s974, 768
          %s985 = sadd.s32 %s983, %s984
          %s986 = smul.addr %s985, 128
          %s987 = scalar_lea.hbm %s2, %s986
          %s989 = sshll.u32 1, 14
          %s990 = sxor.u32 4294967295, %s989
          %s993 = sshll.u32 7, 18
          %s994 = sxor.u32 4294967295, %s993
          %s995 = sand.u32 0, %s994
          %s997 = sor.u32 %s995, 0
          %s999 = sshll.u32 3, 24
          %s1000 = sxor.u32 4294967295, %s999
          %s1001 = sand.u32 %s997, %s1000
          %s1003 = sor.u32 %s1001, 0
          %s1004 = sshll.u32 %s970, 4
          %s1005 = int_to_ptr.vmem [resolvable:$true] %s1004
          %1011 = sst [smem:[#allocation9]] 12288
          %s1012 = scalar_lea.smem [#allocation9], 1
          %1013 = sst [smem:[%s1012]] 98304
          %s1014 = scalar_lea.smem [#allocation9], 2
          %1015 = sst [smem:[%s1014]] 32
          %s1016 = scalar_lea.smem [#allocation9], 3
          %1017 = sst [smem:[%s1016]] 384
          %s1018 = scalar_lea.smem [#allocation9], 4
          %1019 = sst [smem:[%s1018]] 384
          %s1020 = scalar_lea.smem [#allocation9], 5
          %1021 = sst [smem:[%s1020]] 24
          %1023 = dma.general %s1005, 24576, %s987, %s967, [#allocation8], [#allocation9], %s1003, 0
        $region36: #{relative_position_bias.1} parent=27 // pred_fallthru
          _
      $region28: #{relative_position_bias.1} parent=5 // pred_fallthru
        _
      %p1024 = scmp.le.s32.totalorder 2, %s14
      // Predicated region
      $region37: #{relative_position_bias.1} parent=5 // pred_check
        %p1025 = pneg %p1024
      $region38: #{relative_position_bias.1} parent=5 // pred_check_branch
        %1027 = sbr.rel (%p1025) target = $region40
      $region39: #{relative_position_bias.1} parent=5 // pred_region
        %s1028 = ssub.s32 %s14, 2
        // Predicated region
        $region41: #{relative_position_bias.1} parent=39 // pred_check
          %p1029 = pneg %p137
        $region42: #{relative_position_bias.1} parent=39 // pred_check_branch
          %1031 = sbr.rel (%p1029) target = $region44
        $region43: #{relative_position_bias.1} parent=39 // pred_region
          %s1032 = sand.u32 %s122, 1
          %s1033 = scalar_lea.sflag [#allocation4], %s1032
          %s1034 = sand.u32 %s122, 1
          %s1035 = smul.addr %s1034, 1536
          %s1036 = scalar_lea.vmem [#allocation5], %s1035
          %1037 = dma.done %s1033, 24576
        $region44: #{relative_position_bias.1} parent=39 // pred_fallthru
          _
      $region40: #{relative_position_bias.1} parent=5 // pred_fallthru
        _
    $region6: #{relative_position_bias.1} parent=1 // loop_footer
      %s18 = sadd.s32 1, %s14
    $region7: #{relative_position_bias.1} parent=1 // loop_footer_branch
      %13 = sbr.rel target = $region3
    $region8: #{relative_position_bias.1} parent=1 // loop_exit
      _
    %1038 = vsyncpa [#allocation3], 1
    %s1039 = scalar_lea.sflag [#allocation3], 1
    %1040 = vsyncpa %s1039, 1
    %1041 = vsyncpa [#allocation4], 1
    %s1042 = scalar_lea.sflag [#allocation4], 1
    %1043 = vsyncpa %s1042, 1

</llo_original>
